<compile_context>
chip_gen: v6e
topology: v6e:2x2x1
jax: 0.10.0
libtpu: 0.0.40
codegen_flags: <defaults>
</compile_context>

<pallas_src>
import functools

import jax
import jax.numpy as jnp
from jax.experimental import pallas as pl
from jax.experimental.pallas import tpu as pltpu

LN_EPS = 1e-12
ACT_DTYPE = jnp.bfloat16        # inter-kernel activation dtype (halves HBM traffic)
WEIGHT_DTYPE = jnp.bfloat16     # MXU operand dtype (native on v5e/v6e/v7x)


def _default_vmem_limit():
    """3/4 of per-core VMEM, capped; falls back to 64 MiB if the query fails."""
    cap = None
    try:
        cap = pltpu.get_tpu_info().vmem_capacity_bytes
    except Exception:
        cap = None
    if not cap:
        return 64 * 1024 * 1024
    return min(int(cap) * 3 // 4, 96 * 1024 * 1024)


_VMEM_LIMIT = _default_vmem_limit()


# ----------------------------- in-kernel helpers -----------------------------
def _layernorm(y, gamma, beta):
    mu = jnp.mean(y, axis=-1, keepdims=True)
    var = jnp.mean((y - mu) ** 2, axis=-1, keepdims=True)
    return (y - mu) * jax.lax.rsqrt(var + LN_EPS) * gamma + beta


def _gelu(x):
    # tanh-approximate GELU (see TODO above).
    return 0.5 * x * (1.0 + jnp.tanh(0.7978845608028654 * (x + 0.044715 * x * x * x)))


def _pick_tile(dim, cap, step, pref_step=None):
    """Largest tile <= cap dividing `dim`, preferring multiples of pref_step (MXU shape)."""
    if dim <= cap:
        return dim
    for s in [x for x in (pref_step, step) if x]:
        t = (cap // s) * s
        while t >= s:
            if dim % t == 0:
                return t
            t -= s
    return dim  # fallback: full dim always divides (see TODO about padding)


def _heads_per_group(num_heads, head_dim):
    """Group heads so one group spans >= 128 lanes (lane-dense slices/stores)."""
    if head_dim >= 128:
        return 1
    hpg = max(1, min(num_heads, 128 // head_dim))
    while num_heads % hpg != 0:
        hpg -= 1
    return hpg


# ------------------------- fused linear (+epilogue) kernel -------------------------
def _fused_linear_kernel(*refs, activation, fuse_res_ln):
    if fuse_res_ln:
        x_ref, w_ref, b_ref, res_ref, g_ref, beta_ref, o_ref, acc_ref = refs
    else:
        x_ref, w_ref, b_ref, o_ref, acc_ref = refs

    k = pl.program_id(2)

    @pl.when(k == 0)
    def _init():
        acc_ref[...] = jnp.zeros_like(acc_ref)

    # Operands are already bf16 in HBM (cast at param-prep / previous-kernel output);
    # no per-K-step VPU cast, f32 accumulation on the MXU.
    acc_ref[...] += jnp.dot(x_ref[...], w_ref[...], preferred_element_type=jnp.float32)

    @pl.when(k == pl.num_programs(2) - 1)
    def _finalize():
        y = acc_ref[...] + b_ref[...].astype(jnp.float32)   # bias only on last K step
        if activation == "gelu":
            y = _gelu(y)
        if fuse_res_ln:
            y = _layernorm(y + res_ref[...].astype(jnp.float32),
                           g_ref[...], beta_ref[...])
        o_ref[...] = y.astype(o_ref.dtype)


def fused_linear(x, w, b, *, residual=None, gamma=None, beta=None, activation=None,
                 out_dtype=ACT_DTYPE, tm_cap=256, tn_cap=512, tk_cap=512):
    """y = act(x @ w + b); optionally y = LayerNorm(y + residual) * gamma + beta."""
    M, K = x.shape
    N = w.shape[1]
    fuse_res_ln = residual is not None

    tm = _pick_tile(M, tm_cap, 8)
    # Keep >= 2 blocks on the M (parallel) axis when possible so both v7x cores get work
    # (the j axis collapses to 1 whenever the LN epilogue forces tn = N).
    if M // tm == 1 and tm % 16 == 0:
        tm //= 2
    tk = _pick_tile(K, tk_cap, 128, pref_step=256)
    # LayerNorm reduces over N -> keep full rows resident when the LN epilogue is fused.
    tn = N if fuse_res_ln else _pick_tile(N, tn_cap, 128, pref_step=256)
    assert M % tm == 0 and N % tn == 0 and K % tk == 0, (M, N, K, tm, tn, tk)
    grid = (M // tm, N // tn, K // tk)

    in_specs = [
        pl.BlockSpec((tm, tk), lambda i, j, k: (i, k)),
        pl.BlockSpec((tk, tn), lambda i, j, k: (k, j)),
        pl.BlockSpec((1, tn), lambda i, j, k: (0, j)),
    ]
    inputs = [x, w, b.reshape(1, N)]
    if fuse_res_ln:
        in_specs += [
            pl.BlockSpec((tm, N), lambda i, j, k: (i, 0)),
            pl.BlockSpec((1, N), lambda i, j, k: (0, 0)),
            pl.BlockSpec((1, N), lambda i, j, k: (0, 0)),
        ]
        inputs += [residual, gamma.reshape(1, N), beta.reshape(1, N)]

    kernel = functools.partial(
        _fused_linear_kernel, activation=activation, fuse_res_ln=fuse_res_ln)

    return pl.pallas_call(
        kernel,
        out_shape=jax.ShapeDtypeStruct((M, N), out_dtype),
        grid=grid,
        in_specs=in_specs,
        out_specs=pl.BlockSpec((tm, tn), lambda i, j, k: (i, j)),
        scratch_shapes=[pltpu.VMEM((tm, tn), jnp.float32)],
        compiler_params=pltpu.CompilerParams(
            dimension_semantics=("parallel", "parallel", "arbitrary"),
            vmem_limit_bytes=_VMEM_LIMIT),
    )(*inputs)


# ------------------------- embedding sum + LayerNorm kernel -------------------------
def _embed_ln_kernel(we_ref, te_ref, pe_ref, g_ref, b_ref, o_ref):
    y = (we_ref[0].astype(jnp.float32)
         + te_ref[0].astype(jnp.float32)
         + pe_ref[...].astype(jnp.float32))
    o_ref[0] = _layernorm(y, g_ref[...], b_ref[...]).astype(o_ref.dtype)


def embed_layernorm(we, te, pe, gamma, beta, *, out_dtype=ACT_DTYPE, ts_cap=512):
    """LayerNorm(word_emb + type_emb + pos_emb); pos_emb stays (S, H), never broadcast."""
    B, S, H = we.shape
    ts = _pick_tile(S, ts_cap, 8)
    assert S % ts == 0
    return pl.pallas_call(
        _embed_ln_kernel,
        out_shape=jax.ShapeDtypeStruct((B, S, H), out_dtype),
        grid=(B, S // ts),
        in_specs=[
            pl.BlockSpec((1, ts, H), lambda b, i: (b, i, 0)),
            pl.BlockSpec((1, ts, H), lambda b, i: (b, i, 0)),
            pl.BlockSpec((ts, H), lambda b, i: (i, 0)),
            pl.BlockSpec((1, H), lambda b, i: (0, 0)),
            pl.BlockSpec((1, H), lambda b, i: (0, 0)),
        ],
        out_specs=pl.BlockSpec((1, ts, H), lambda b, i: (b, i, 0)),
        compiler_params=pltpu.CompilerParams(
            dimension_semantics=("parallel", "parallel"),
            vmem_limit_bytes=_VMEM_LIMIT),
    )(we, te, pe, gamma.reshape(1, H), beta.reshape(1, H))


# ------------------------- multi-head attention kernel -------------------------
def _attention_kernel(qkv_ref, m_ref, o_ref, *, num_heads, head_dim,
                      heads_per_group, q_tile):
    H = num_heads * head_dim
    gw = heads_per_group * head_dim
    num_groups = num_heads // heads_per_group

    qi = pl.program_id(1)
    row0 = qi * q_tile
    if q_tile % 8 == 0:
        row0 = pl.multiple_of(row0, 8)
    mask = m_ref[0].astype(jnp.float32)          # (1, S) additive mask, broadcasts over rows

    # The attention scale is pre-folded into wq/bq at parameter-prep time.
    for g in range(num_groups):                  # static loop over 128-lane head groups
        glo = g * gw
        q_g = qkv_ref[0, pl.ds(row0, q_tile), glo:glo + gw]        # (tq, gw) bf16
        k_g = qkv_ref[0, :, H + glo:H + glo + gw]                  # (S, gw)  bf16
        v_g = qkv_ref[0, :, 2 * H + glo:2 * H + glo + gw]          # (S, gw)  bf16
        ctx_parts = []
        for h in range(heads_per_group):         # per-head dots inside the lane-dense group
            lo = h * head_dim
            hi = lo + head_dim
            s = jax.lax.dot_general(q_g[:, lo:hi], k_g[:, lo:hi],
                                    (((1,), (1,)), ((), ())),
                                    preferred_element_type=jnp.float32)   # (tq, S) f32
            s = s + mask
            s = s - jnp.max(s, axis=-1, keepdims=True)
            p = jnp.exp(s)
            p = p * pl.reciprocal(jnp.sum(p, axis=-1, keepdims=True), approx=True)
            ctx_parts.append(jnp.dot(p.astype(v_g.dtype), v_g[:, lo:hi],
                                     preferred_element_type=jnp.float32))  # (tq, dh)
        ctx = ctx_parts[0] if heads_per_group == 1 else jnp.concatenate(ctx_parts, axis=-1)
        o_ref[0, :, glo:glo + gw] = ctx.astype(o_ref.dtype)        # lane-dense group store


def attention(qkv, add_mask, num_heads, *, out_dtype=ACT_DTYPE, tq_cap=256):
    B, S, threeH = qkv.shape
    H = threeH // 3
    dh = H // num_heads
    hpg = _heads_per_group(num_heads, dh)
    tq = _pick_tile(S, tq_cap, 8)
    assert S % tq == 0
    kernel = functools.partial(
        _attention_kernel, num_heads=num_heads, head_dim=dh,
        heads_per_group=hpg, q_tile=tq)
    return pl.pallas_call(
        kernel,
        out_shape=jax.ShapeDtypeStruct((B, S, H), out_dtype),
        grid=(B, S // tq),
        in_specs=[
            # Full packed (S, 3H) block; index map ignores the query-tile axis so it is
            # DMA'd once per batch element and reused across query tiles.
            pl.BlockSpec((1, S, threeH), lambda b, qi: (b, 0, 0)),
            pl.BlockSpec((1, 1, S), lambda b, qi: (b, 0, 0)),
        ],
        out_specs=pl.BlockSpec((1, tq, H), lambda b, qi: (b, qi, 0)),
        compiler_params=pltpu.CompilerParams(
            dimension_semantics=("parallel", "parallel"),
            vmem_limit_bytes=_VMEM_LIMIT),
    )(qkv, add_mask)


# --------------------------------- model glue ---------------------------------
class Config:
    vocab_size = 100
    type_vocab_size = 2
    max_position = 16
    hidden = 32
    heads = 2
    intermediate = 64
    layers = 2


def init_params(key, cfg):
    std = 0.02
    keys = jax.random.split(key, 3 + cfg.layers)
    H, I = cfg.hidden, cfg.intermediate
    params = {
        "word_emb": jax.random.normal(keys[0], (cfg.vocab_size, H), jnp.float32) * std,
        "pos_emb": jax.random.normal(keys[1], (cfg.max_position, H), jnp.float32) * std,
        "type_emb": jax.random.normal(keys[2], (cfg.type_vocab_size, H), jnp.float32) * std,
        "emb_ln_g": jnp.ones((H,), jnp.float32),
        "emb_ln_b": jnp.zeros((H,), jnp.float32),
        "layers": [],
    }
    for l in range(cfg.layers):
        lk = jax.random.split(keys[3 + l], 6)
        layer = {
            "wq": jax.random.normal(lk[0], (H, H), jnp.float32) * std, "bq": jnp.zeros((H,), jnp.float32),
            "wk": jax.random.normal(lk[1], (H, H), jnp.float32) * std, "bk": jnp.zeros((H,), jnp.float32),
            "wv": jax.random.normal(lk[2], (H, H), jnp.float32) * std, "bv": jnp.zeros((H,), jnp.float32),
            "wo": jax.random.normal(lk[3], (H, H), jnp.float32) * std, "bo": jnp.zeros((H,), jnp.float32),
            "ln1_g": jnp.ones((H,), jnp.float32), "ln1_b": jnp.zeros((H,), jnp.float32),
            "wi": jax.random.normal(lk[4], (H, I), jnp.float32) * std, "bi": jnp.zeros((I,), jnp.float32),
            "wf": jax.random.normal(lk[5], (I, H), jnp.float32) * std, "bf": jnp.zeros((H,), jnp.float32),
            "ln2_g": jnp.ones((H,), jnp.float32), "ln2_b": jnp.zeros((H,), jnp.float32),
        }
        params["layers"].append(layer)
    return params


def prepare_params(params, cfg):
    """One-time parameter prep: QKV concat, scale folding, bf16 weight casts."""
    H = cfg.hidden
    dh = H // cfg.heads
    scale = 1.0 / float(dh) ** 0.5
    prepared = {
        "word_emb": params["word_emb"],
        "pos_emb": params["pos_emb"],
        "type_emb": params["type_emb"],
        "emb_ln_g": params["emb_ln_g"],
        "emb_ln_b": params["emb_ln_b"],
        "layers": [],
    }
    for lp in params["layers"]:
        wqkv = jnp.concatenate([lp["wq"] * scale, lp["wk"], lp["wv"]], axis=1)  # (H, 3H)
        bqkv = jnp.concatenate([lp["bq"] * scale, lp["bk"], lp["bv"]], axis=0)  # (3H,)
        prepared["layers"].append({
            "wqkv": wqkv.astype(WEIGHT_DTYPE), "bqkv": bqkv,
            "wo": lp["wo"].astype(WEIGHT_DTYPE), "bo": lp["bo"],
            "ln1_g": lp["ln1_g"], "ln1_b": lp["ln1_b"],
            "wi": lp["wi"].astype(WEIGHT_DTYPE), "bi": lp["bi"],
            "wf": lp["wf"].astype(WEIGHT_DTYPE), "bf": lp["bf"],
            "ln2_g": lp["ln2_g"], "ln2_b": lp["ln2_b"],
        })
    return prepared


def bert_embedder_forward(prepared, input_ids, attention_mask, token_type_ids, cfg):
    """Pallas-backed forward. batch = (token ids, token mask, token type ids)."""
    B, S = input_ids.shape
    H, nh = cfg.hidden, cfg.heads
    M = B * S

    # Embedding gathers (plain-JAX glue) + fused sum+LayerNorm kernel.
    we = prepared["word_emb"][input_ids]              # (B, S, H)
    te = prepared["type_emb"][token_type_ids]         # (B, S, H)
    pe = prepared["pos_emb"][:S]                      # (S, H) -- never broadcast to (M, H)
    x = embed_layernorm(we, te, pe, prepared["emb_ln_g"], prepared["emb_ln_b"])  # (B,S,H) bf16
    x = x.reshape(M, H)

    # Additive attention mask, HF-BERT convention; one (1, S) row per batch element.
    amask = ((1.0 - attention_mask.astype(jnp.float32)) * -10000.0).reshape(B, 1, S)

    for lp in prepared["layers"]:
        # Fused QKV projection (scale pre-folded into the Q columns at prep time).
        qkv = fused_linear(x, lp["wqkv"], lp["bqkv"])                       # (M, 3H) bf16

        ctx = attention(qkv.reshape(B, S, 3 * H), amask, nh).reshape(M, H)  # (M, H) bf16

        # Attention output projection fused with bias + residual + LayerNorm.
        x = fused_linear(ctx, lp["wo"], lp["bo"], residual=x,
                         gamma=lp["ln1_g"], beta=lp["ln1_b"])

        # FFN: intermediate matmul fused with GELU; output matmul fused with residual+LN.
        inter = fused_linear(x, lp["wi"], lp["bi"], activation="gelu")
        x = fused_linear(inter, lp["wf"], lp["bf"], residual=x,
                         gamma=lp["ln2_g"], beta=lp["ln2_b"])

    # output_all_encoded_layers=False -> return last encoder layer only (f32, like the module).
    return x.reshape(B, S, H).astype(jnp.float32)


def bert_reference(params, input_ids, attention_mask, token_type_ids, cfg):
    """Pure-JAX f32 reference with identical math, for a correctness check."""
    B, S = input_ids.shape
    H, nh = cfg.hidden, cfg.heads
    dh = H // nh

    def ln(y, g, b):
        mu = jnp.mean(y, axis=-1, keepdims=True)
        var = jnp.mean((y - mu) ** 2, axis=-1, keepdims=True)
        return (y - mu) * jax.lax.rsqrt(var + LN_EPS) * g + b

    we = params["word_emb"][input_ids]
    pe = jnp.broadcast_to(params["pos_emb"][:S], (B, S, H))
    te = params["type_emb"][token_type_ids]
    x = ln(we + pe + te, params["emb_ln_g"], params["emb_ln_b"])

    amask = (1.0 - attention_mask.astype(jnp.float32)) * -10000.0
    amask = amask[:, None, None, :]  # (B, 1, 1, S)
    scale = 1.0 / float(dh) ** 0.5

    for lp in params["layers"]:
        q = (x @ lp["wq"] + lp["bq"]).reshape(B, S, nh, dh).transpose(0, 2, 1, 3)
        k = (x @ lp["wk"] + lp["bk"]).reshape(B, S, nh, dh).transpose(0, 2, 1, 3)
        v = (x @ lp["wv"] + lp["bv"]).reshape(B, S, nh, dh).transpose(0, 2, 1, 3)
        s = jnp.einsum("bhqd,bhkd->bhqk", q, k) * scale + amask
        s = s - jnp.max(s, axis=-1, keepdims=True)
        p = jnp.exp(s)
        p = p / jnp.sum(p, axis=-1, keepdims=True)
        ctx = jnp.einsum("bhqk,bhkd->bhqd", p, v).transpose(0, 2, 1, 3).reshape(B, S, H)
        x = ln(ctx @ lp["wo"] + lp["bo"] + x, lp["ln1_g"], lp["ln1_b"])
        inter = _gelu(x @ lp["wi"] + lp["bi"])
        x = ln(inter @ lp["wf"] + lp["bf"] + x, lp["ln2_g"], lp["ln2_b"])
    return x


if __name__ == "__main__":
    cfg = Config()
    key = jax.random.PRNGKey(0)
    pkey, ikey = jax.random.split(key)
    params = init_params(pkey, cfg)
    prepared = prepare_params(params, cfg)

    B, S = 2, 8
    input_ids = jax.random.randint(ikey, (B, S), 0, cfg.vocab_size)          # batch[0]
    attention_mask = jnp.array([[1, 1, 1, 1, 1, 1, 1, 1],
                                [1, 1, 1, 1, 1, 0, 0, 0]], dtype=jnp.int32)  # batch[1]
    token_type_ids = jnp.array([[0, 0, 0, 0, 1, 1, 1, 1],
                                [0, 0, 0, 0, 1, 1, 1, 1]], dtype=jnp.int32)  # batch[2]

    out = bert_embedder_forward(prepared, input_ids, attention_mask, token_type_ids, cfg)
    out = jax.block_until_ready(out)

    ref = bert_reference(params, input_ids, attention_mask, token_type_ids, cfg)
    assert out.shape == (B, S, cfg.hidden), out.shape
    max_err = float(jnp.max(jnp.abs(out - ref)))
    # bf16 activations/weights (f32 accumulation & LN/softmax) vs. a pure-f32 reference.
    assert max_err < 5e-2, f"mismatch vs reference: {max_err}"
    print("KERNEL_OK")
</pallas_src>

<mosaic_0001>
module attributes {stable_mosaic.version = 11 : i64} {
  func.func @_embed_ln_kernel(%arg0: i32, %arg1: i32, %arg2: memref<1x8x32xf32, #tpu.memory_space<vmem>>, %arg3: memref<1x8x32xf32, #tpu.memory_space<vmem>>, %arg4: memref<8x32xf32, #tpu.memory_space<vmem>>, %arg5: memref<1x32xf32, #tpu.memory_space<vmem>>, %arg6: memref<1x32xf32, #tpu.memory_space<vmem>>, %arg7: memref<1x8x32xbf16, #tpu.memory_space<vmem>>) attributes {dimension_semantics = [#tpu.dimension_semantics<parallel>, #tpu.dimension_semantics<parallel>], iteration_bounds = array<i64: 2, 1>, scalar_prefetch = 0 : i64, scratch_operands = 0 : i64, tpu.core_type = #tpu.core_type<tc>, window_params = [{transform_indices = @transform_0, window_bounds = array<i64: 1, 8, 32>}, {transform_indices = @transform_1, window_bounds = array<i64: 1, 8, 32>}, {transform_indices = @transform_2, window_bounds = array<i64: 8, 32>}, {pipeline_mode = #tpu.pipeline_mode<synchronous>, transform_indices = @transform_3, window_bounds = array<i64: 1, 32>}, {pipeline_mode = #tpu.pipeline_mode<synchronous>, transform_indices = @transform_4, window_bounds = array<i64: 1, 32>}, {transform_indices = @transform_5, window_bounds = array<i64: 1, 8, 32>}]} {
    %c0 = arith.constant 0 : index
    %c0_0 = arith.constant 0 : index
    %c0_1 = arith.constant 0 : index
    %0 = vector.load %arg2[%c0, %c0_0, %c0_1] : memref<1x8x32xf32, #tpu.memory_space<vmem>>, vector<1x8x32xf32>
    %1 = vector.shape_cast %0 : vector<1x8x32xf32> to vector<8x32xf32>
    %c0_2 = arith.constant 0 : index
    %c0_3 = arith.constant 0 : index
    %c0_4 = arith.constant 0 : index
    %2 = vector.load %arg3[%c0_2, %c0_3, %c0_4] : memref<1x8x32xf32, #tpu.memory_space<vmem>>, vector<1x8x32xf32>
    %3 = vector.shape_cast %2 : vector<1x8x32xf32> to vector<8x32xf32>
    %4 = arith.addf %1, %3 : vector<8x32xf32>
    %c0_5 = arith.constant 0 : index
    %c0_6 = arith.constant 0 : index
    %5 = vector.load %arg4[%c0_5, %c0_6] : memref<8x32xf32, #tpu.memory_space<vmem>>, vector<8x32xf32>
    %6 = arith.addf %4, %5 : vector<8x32xf32>
    %c0_7 = arith.constant 0 : index
    %c0_8 = arith.constant 0 : index
    %7 = vector.load %arg5[%c0_7, %c0_8] : memref<1x32xf32, #tpu.memory_space<vmem>>, vector<1x32xf32>
    %c0_9 = arith.constant 0 : index
    %c0_10 = arith.constant 0 : index
    %8 = vector.load %arg6[%c0_9, %c0_10] : memref<1x32xf32, #tpu.memory_space<vmem>>, vector<1x32xf32>
    %cst = arith.constant dense<0.000000e+00> : vector<8xf32>
    %9 = vector.multi_reduction <add>, %6, %cst [1] : vector<8x32xf32> to vector<8xf32>
    %10 = vector.shape_cast %9 : vector<8xf32> to vector<8x1xf32>
    %cst_11 = arith.constant 3.200000e+01 : f32
    %11 = vector.broadcast %cst_11 : f32 to vector<8x1xf32>
    %12 = arith.divf %10, %11 : vector<8x1xf32>
    %13 = vector.broadcast %12 : vector<8x1xf32> to vector<8x32xf32>
    %14 = arith.subf %6, %13 : vector<8x32xf32>
    %15 = arith.mulf %14, %14 : vector<8x32xf32>
    %cst_12 = arith.constant dense<0.000000e+00> : vector<8xf32>
    %16 = vector.multi_reduction <add>, %15, %cst_12 [1] : vector<8x32xf32> to vector<8xf32>
    %17 = vector.shape_cast %16 : vector<8xf32> to vector<8x1xf32>
    %cst_13 = arith.constant 3.200000e+01 : f32
    %18 = vector.broadcast %cst_13 : f32 to vector<8x1xf32>
    %19 = arith.divf %17, %18 : vector<8x1xf32>
    %20 = vector.broadcast %12 : vector<8x1xf32> to vector<8x32xf32>
    %21 = arith.subf %6, %20 : vector<8x32xf32>
    %cst_14 = arith.constant 9.99999996E-13 : f32
    %22 = vector.broadcast %cst_14 : f32 to vector<8x1xf32>
    %23 = arith.addf %19, %22 : vector<8x1xf32>
    %24 = math.rsqrt %23 : vector<8x1xf32>
    %25 = vector.broadcast %24 : vector<8x1xf32> to vector<8x32xf32>
    %26 = arith.mulf %21, %25 : vector<8x32xf32>
    %27 = vector.broadcast %7 : vector<1x32xf32> to vector<8x32xf32>
    %28 = arith.mulf %26, %27 : vector<8x32xf32>
    %29 = vector.broadcast %8 : vector<1x32xf32> to vector<8x32xf32>
    %30 = arith.addf %28, %29 : vector<8x32xf32>
    %31 = arith.truncf %30 : vector<8x32xf32> to vector<8x32xbf16>
    %c0_15 = arith.constant 0 : index
    %c0_16 = arith.constant 0 : index
    %c0_17 = arith.constant 0 : index
    %32 = vector.load %arg7[%c0_15, %c0_16, %c0_17] : memref<1x8x32xbf16, #tpu.memory_space<vmem>>, vector<1x8x32xbf16>
    %33 = vector.shape_cast %32 : vector<1x8x32xbf16> to vector<8x32xbf16>
    %34 = vector.shape_cast %31 : vector<8x32xbf16> to vector<1x8x32xbf16>
    tpu.vector_store %arg7[%c0_15, %c0_16, %c0_17], %34 {strides = array<i32>} : memref<1x8x32xbf16, #tpu.memory_space<vmem>>, vector<1x8x32xbf16>,
    return
  }
  func.func @transform_0(%arg0: i32, %arg1: i32) -> (i32, i32, i32) {
    %c0_i32 = arith.constant 0 : i32
    %c0_i32_0 = arith.constant 0 : i32
    return %arg0, %arg1, %c0_i32 : i32, i32, i32
  }
  func.func @transform_1(%arg0: i32, %arg1: i32) -> (i32, i32, i32) {
    %c0_i32 = arith.constant 0 : i32
    %c0_i32_0 = arith.constant 0 : i32
    return %arg0, %arg1, %c0_i32 : i32, i32, i32
  }
  func.func @transform_2(%arg0: i32, %arg1: i32) -> (i32, i32) {
    %c0_i32 = arith.constant 0 : i32
    %c0_i32_0 = arith.constant 0 : i32
    return %arg1, %c0_i32 : i32, i32
  }
  func.func @transform_3(%arg0: i32, %arg1: i32) -> (i32, i32) {
    %c0_i32 = arith.constant 0 : i32
    %c0_i32_0 = arith.constant 0 : i32
    %c0_i32_1 = arith.constant 0 : i32
    return %c0_i32, %c0_i32_0 : i32, i32
  }
  func.func @transform_4(%arg0: i32, %arg1: i32) -> (i32, i32) {
    %c0_i32 = arith.constant 0 : i32
    %c0_i32_0 = arith.constant 0 : i32
    %c0_i32_1 = arith.constant 0 : i32
    return %c0_i32, %c0_i32_0 : i32, i32
  }
  func.func @transform_5(%arg0: i32, %arg1: i32) -> (i32, i32, i32) {
    %c0_i32 = arith.constant 0 : i32
    %c0_i32_0 = arith.constant 0 : i32
    return %arg0, %arg1, %c0_i32 : i32, i32, i32
  }
}

</mosaic_0001>

<llo_original>
// kernel: tpu_custom_call.1
$region0: #{tpu_custom_call.1}
  #allocation0 [shape = 'u32[]', space=smem, size = 0x4, offset = 0x4, fixed_abs, tag = 'smem constant byte address 0x4 - core index']
  #allocation1 [shape = 'u32[144,128]{1,0:T(1,128)}', space=vmem, size = 0x12000, scoped, tag = 'internal scratch']
  %s0 = inlined_call_operand.hbm [shape: f32[2,8,32], index: 0, kind: input, shape index: {}]
  %s1 = inlined_call_operand.hbm [shape: f32[2,8,32], index: 1, kind: input, shape index: {}]
  %s2 = inlined_call_operand.hbm [shape: f32[8,32], index: 2, kind: input, shape index: {}]
  %s3 = inlined_call_operand.vmem [shape: f32[1,32], index: 3, kind: input, shape index: {}]
  %s4 = inlined_call_operand.vmem [shape: f32[1,32], index: 4, kind: input, shape index: {}]
  %s5 = inlined_call_operand.hbm [shape: bf16[2,8,32], index: 5, kind: output, shape index: {}]
  %s6 = sld [smem:[#allocation0]]
  $region65: #{tpu_custom_call.1} parent=0
    _
  %s8 = ssub.s32 1, %s6
  %s9 = scalar_select 0, %s8, %s6
  $region1: #{tpu_custom_call.1} parent=0
    #allocation2 [shape = 'u8[8192]{0}', space=vmem, size = 0x2000, scoped, tag = 'input window, operand 0']
    #allocation3 [shape = 's32[2]{0}', space=sflag, size = 0x8, scoped, tag = 'scoped memory for tpu_custom_call.1']
    #allocation4 [shape = 's32[2]{0}', space=sflag, size = 0x8, scoped, tag = 'scoped memory for tpu_custom_call.1']
    #allocation5 [shape = 'u8[8192]{0}', space=vmem, size = 0x2000, scoped, tag = 'input window, operand 1']
    #allocation6 [shape = 's32[2]{0}', space=sflag, size = 0x8, scoped, tag = 'scoped memory for tpu_custom_call.1']
    #allocation7 [shape = 'u8[4096]{0}', space=vmem, size = 0x1000, scoped, tag = 'input window, operand 2, single buffered']
    #allocation8 [shape = 'u8[4096]{0}', space=vmem, size = 0x1000, scoped, tag = 'output window, operand 0']
    %10 = vsyncpa [#allocation3], 0
    %s11 = scalar_lea.sflag [#allocation3], 1
    %12 = vsyncpa %s11, 0
    %13 = vsyncpa [#allocation6], 0
    %s14 = scalar_lea.sflag [#allocation6], 1
    %15 = vsyncpa %s14, 0
    %16 = vsyncpa [#allocation4], 0
    %s17 = scalar_lea.sflag [#allocation4], 1
    %18 = vsyncpa %s17, 0
    loop: start=0, step=1, limit=4
    $region2: #{tpu_custom_call.1} parent=1 // loop_pre_header
      _
    $region3: #{tpu_custom_call.1} parent=1 // loop_header
      %s20 = sphi 0, %s24
      %p21 = scmp.ge.s32.totalorder %s20, 4
      %s27 = sphi 0, %s39
      %s28 = sphi 0, %s35
      %s29 = sphi 0, %s27
      %s30 = sphi 0, %s28
      %s31 = sphi 0, %s29
      %s32 = sphi 0, %s30
      %s44 = sphi 0, %s46
      %s47 = sphi 0, %s44
      %s48 = sphi 0, %s47
      %s64 = sphi 0, %s48
      %s72 = sphi 0, %s74
      %s75 = sphi 0, %s72
      %s76 = sphi 0, %s75
      %s92 = sphi 0, %s76
      %s98 = sphi 0, %s100
      %s101 = sphi 0, %s98
      %s102 = sphi 0, %s101
      %s118 = sphi 0, %s102
      %s122 = sphi 0, %s122
      %s124 = sphi 0, %s122
      %s125 = sphi 0, %s124
      %s139 = sphi 0, %s125
      %s143 = sphi 0, %s143
      %s145 = sphi 0, %s143
      %s146 = sphi 0, %s145
      %s160 = sphi 0, %s146
      %s168 = sphi 0, %s170
      %s171 = sphi 0, %s168
      %s172 = sphi 0, %s171
      %s188 = sphi 0, %s172
    $region4: #{tpu_custom_call.1} parent=1 // loop_header_branch
      %23 = sbr.rel (%p21) target = $region8
    $region5: #{tpu_custom_call.1} parent=1 // loop_body
      %s25 = ssub.s32 %s20, 1
      %s26 = ssub.s32 %s20, 2
      %s33 = sadd.s32 1, %s28
      %p34 = scmp.ge.s32.totalorder %s33, 1
      %s35 = scalar_select %p34, 0, %s33
      %s36 = sadd.s32 1, %s27
      %s37 = scalar_select %p34, %s36, %s27
      %p38 = scmp.ge.s32.totalorder %s37, 2
      %s39 = scalar_select %p38, 0, %s37
      %s40 = ssub.s32 %s27, %s39
      %s41 = ssub.s32 %s28, %s35
      %s42 = sor.u32 %s40, %s41
      %p43 = scmp.eq.s32.totalorder %s42, 0
      %s45 = sadd.s32 %s44, 1
      %s46 = scalar_select %p43, %s44, %s45
      %p49 = pneg %p43
      %p50 = scmp.eq.s32.totalorder %s20, 1
      %p51 = por %p49, %p50
      %p52 = scmp.ne.s32.totalorder %s44, %s47
      %p53 = scmp.eq.s32.totalorder %s20, 0
      %p54 = por %p52, %p53
      %p55 = scmp.ne.s32.totalorder %s44, %s47
      %p56 = scmp.eq.s32.totalorder %s25, 1
      %p57 = por %p55, %p56
      %p58 = scmp.ne.s32.totalorder %s47, %s48
      %p59 = scmp.eq.s32.totalorder %s25, 0
      %p60 = por %p58, %p59
      %p61 = scmp.ne.s32.totalorder %s47, %s48
      %p62 = scmp.eq.s32.totalorder %s26, 1
      %p63 = por %p61, %p62
      %p65 = scmp.ne.s32.totalorder %s48, %s64
      %p66 = scmp.eq.s32.totalorder %s26, 0
      %p67 = por %p65, %p66
      %s68 = ssub.s32 %s27, %s39
      %s69 = ssub.s32 %s28, %s35
      %s70 = sor.u32 %s68, %s69
      %p71 = scmp.eq.s32.totalorder %s70, 0
      %s73 = sadd.s32 %s72, 1
      %s74 = scalar_select %p71, %s72, %s73
      %p77 = pneg %p71
      %p78 = scmp.eq.s32.totalorder %s20, 1
      %p79 = por %p77, %p78
      %p80 = scmp.ne.s32.totalorder %s72, %s75
      %p81 = scmp.eq.s32.totalorder %s20, 0
      %p82 = por %p80, %p81
      %p83 = scmp.ne.s32.totalorder %s72, %s75
      %p84 = scmp.eq.s32.totalorder %s25, 1
      %p85 = por %p83, %p84
      %p86 = scmp.ne.s32.totalorder %s75, %s76
      %p87 = scmp.eq.s32.totalorder %s25, 0
      %p88 = por %p86, %p87
      %p89 = scmp.ne.s32.totalorder %s75, %s76
      %p90 = scmp.eq.s32.totalorder %s26, 1
      %p91 = por %p89, %p90
      %p93 = scmp.ne.s32.totalorder %s76, %s92
      %p94 = scmp.eq.s32.totalorder %s26, 0
      %p95 = por %p93, %p94
      %s96 = ssub.s32 %s28, %s35
      %p97 = scmp.eq.s32.totalorder %s96, 0
      %s99 = sadd.s32 %s98, 1
      %s100 = scalar_select %p97, %s98, %s99
      %p103 = pneg %p97
      %p104 = scmp.eq.s32.totalorder %s20, 1
      %p105 = por %p103, %p104
      %p106 = scmp.ne.s32.totalorder %s98, %s101
      %p107 = scmp.eq.s32.totalorder %s20, 0
      %p108 = por %p106, %p107
      %p109 = scmp.ne.s32.totalorder %s98, %s101
      %p110 = scmp.eq.s32.totalorder %s25, 1
      %p111 = por %p109, %p110
      %p112 = scmp.ne.s32.totalorder %s101, %s102
      %p113 = scmp.eq.s32.totalorder %s25, 0
      %p114 = por %p112, %p113
      %p115 = scmp.ne.s32.totalorder %s101, %s102
      %p116 = scmp.eq.s32.totalorder %s26, 1
      %p117 = por %p115, %p116
      %p119 = scmp.ne.s32.totalorder %s102, %s118
      %p120 = scmp.eq.s32.totalorder %s26, 0
      %p121 = por %p119, %p120
      %s123 = sadd.s32 %s122, 1
      %p126 = scmp.eq.s32.totalorder %s20, 1
      %p127 = scmp.ne.s32.totalorder %s122, %s124
      %p128 = scmp.eq.s32.totalorder %s20, 0
      %p129 = por %p127, %p128
      %p130 = scmp.ne.s32.totalorder %s122, %s124
      %p131 = scmp.eq.s32.totalorder %s25, 1
      %p132 = por %p130, %p131
      %p133 = scmp.ne.s32.totalorder %s124, %s125
      %p134 = scmp.eq.s32.totalorder %s25, 0
      %p135 = por %p133, %p134
      %p136 = scmp.ne.s32.totalorder %s124, %s125
      %p137 = scmp.eq.s32.totalorder %s26, 1
      %p138 = por %p136, %p137
      %p140 = scmp.ne.s32.totalorder %s125, %s139
      %p141 = scmp.eq.s32.totalorder %s26, 0
      %p142 = por %p140, %p141
      %s144 = sadd.s32 %s143, 1
      %p147 = scmp.eq.s32.totalorder %s20, 1
      %p148 = scmp.ne.s32.totalorder %s143, %s145
      %p149 = scmp.eq.s32.totalorder %s20, 0
      %p150 = por %p148, %p149
      %p151 = scmp.ne.s32.totalorder %s143, %s145
      %p152 = scmp.eq.s32.totalorder %s25, 1
      %p153 = por %p151, %p152
      %p154 = scmp.ne.s32.totalorder %s145, %s146
      %p155 = scmp.eq.s32.totalorder %s25, 0
      %p156 = por %p154, %p155
      %p157 = scmp.ne.s32.totalorder %s145, %s146
      %p158 = scmp.eq.s32.totalorder %s26, 1
      %p159 = por %p157, %p158
      %p161 = scmp.ne.s32.totalorder %s146, %s160
      %p162 = scmp.eq.s32.totalorder %s26, 0
      %p163 = por %p161, %p162
      %s164 = ssub.s32 %s27, %s39
      %s165 = ssub.s32 %s28, %s35
      %s166 = sor.u32 %s164, %s165
      %p167 = scmp.eq.s32.totalorder %s166, 0
      %s169 = sadd.s32 %s168, 1
      %s170 = scalar_select %p167, %s168, %s169
      %p173 = pneg %p167
      %p174 = scmp.eq.s32.totalorder %s20, 1
      %p175 = por %p173, %p174
      %p176 = scmp.ne.s32.totalorder %s168, %s171
      %p177 = scmp.eq.s32.totalorder %s20, 0
      %p178 = por %p176, %p177
      %p179 = scmp.ne.s32.totalorder %s168, %s171
      %p180 = scmp.eq.s32.totalorder %s25, 1
      %p181 = por %p179, %p180
      %p182 = scmp.ne.s32.totalorder %s171, %s172
      %p183 = scmp.eq.s32.totalorder %s25, 0
      %p184 = por %p182, %p183
      %p185 = scmp.ne.s32.totalorder %s171, %s172
      %p186 = scmp.eq.s32.totalorder %s26, 1
      %p187 = por %p185, %p186
      %p189 = scmp.ne.s32.totalorder %s172, %s188
      %p190 = scmp.eq.s32.totalorder %s26, 0
      %p191 = por %p189, %p190
      %p192 = scmp.le.s32.totalorder 1, %s20
      %p193 = scmp.lt.s32.totalorder %s20, 3
      %p194 = pnand %p192, %p193
      %p195 = pneg %p194
      // Predicated region
      $region9: #{tpu_custom_call.1} parent=5 // pred_check
        _
      $region10: #{tpu_custom_call.1} parent=5 // pred_check_branch
        %197 = sbr.rel (%p194) target = $region12
      $region11: #{tpu_custom_call.1} parent=5 // pred_region
        %s198 = ssub.s32 %s20, 1
        // Predicated region
        $region13: #{tpu_custom_call.1} parent=11 // pred_check
          %p199 = pneg %p114
        $region14: #{tpu_custom_call.1} parent=11 // pred_check_branch
          %201 = sbr.rel (%p199) target = $region16
        $region15: #{tpu_custom_call.1} parent=11 // pred_region
          %s203 = ssub.s32 128, 128
          %204 = vsyncadd [#allocation6], %s203
          %s205 = smul.addr %s30, 128
          %s206 = scalar_lea.hbm %s2, %s205
          %s208 = sshll.u32 [#allocation7], 4
          %s209 = int_to_ptr.vmem [resolvable:$true] %s208
          %211 = dma.hbm_to_vmem [thread:$0]  %s206, 128, %s209, [#allocation6]
        $region16: #{tpu_custom_call.1} parent=11 // pred_fallthru
          _
        // Predicated region
        $region17: #{tpu_custom_call.1} parent=11 // pred_check
          %p212 = pneg %p135
        $region18: #{tpu_custom_call.1} parent=11 // pred_check_branch
          %214 = sbr.rel (%p212) target = $region20
        $region19: #{tpu_custom_call.1} parent=11 // pred_region
          _
        $region20: #{tpu_custom_call.1} parent=11 // pred_fallthru
          _
        // Predicated region
        $region21: #{tpu_custom_call.1} parent=11 // pred_check
          %p215 = pneg %p156
        $region22: #{tpu_custom_call.1} parent=11 // pred_check_branch
          %217 = sbr.rel (%p215) target = $region24
        $region23: #{tpu_custom_call.1} parent=11 // pred_region
          _
        $region24: #{tpu_custom_call.1} parent=11 // pred_fallthru
          _
      $region12: #{tpu_custom_call.1} parent=5 // pred_fallthru
        _
      %p218 = scmp.lt.s32.totalorder %s20, 2
      // Predicated region
      $region25: #{tpu_custom_call.1} parent=5 // pred_check
        %p219 = pneg %p218
      $region26: #{tpu_custom_call.1} parent=5 // pred_check_branch
        %221 = sbr.rel (%p219) target = $region28
      $region27: #{tpu_custom_call.1} parent=5 // pred_region
        // Predicated region
        $region29: #{tpu_custom_call.1} parent=27 // pred_check
          %p222 = pneg %p54
        $region30: #{tpu_custom_call.1} parent=27 // pred_check_branch
          %224 = sbr.rel (%p222) target = $region32
        $region31: #{tpu_custom_call.1} parent=27 // pred_region
          %s225 = sand.u32 %s44, 1
          %s226 = scalar_lea.sflag [#allocation3], %s225
          %s227 = sand.u32 %s44, 1
          %s228 = smul.addr %s227, 8
          %s229 = scalar_lea.vmem [#allocation2], %s228
          %s231 = ssub.s32 128, 128
          %232 = vsyncadd %s226, %s231
          %s233 = sadd.s32 %s28, %s27
          %s234 = smul.addr %s233, 128
          %s235 = scalar_lea.hbm %s0, %s234
          %s237 = sshll.u32 %s229, 4
          %s238 = int_to_ptr.vmem [resolvable:$true] %s237
          %240 = dma.hbm_to_vmem [thread:$0]  %s235, 128, %s238, %s226
        $region32: #{tpu_custom_call.1} parent=27 // pred_fallthru
          _
        // Predicated region
        $region33: #{tpu_custom_call.1} parent=27 // pred_check
          %p241 = pneg %p82
        $region34: #{tpu_custom_call.1} parent=27 // pred_check_branch
          %243 = sbr.rel (%p241) target = $region36
        $region35: #{tpu_custom_call.1} parent=27 // pred_region
          %s244 = sand.u32 %s20, 1
          %s245 = scalar_lea.sflag [#allocation6], %s244
          %s246 = sand.u32 %s72, 1
          %s247 = smul.addr %s246, 8
          %s248 = scalar_lea.vmem [#allocation5], %s247
          %s250 = ssub.s32 128, 128
          %251 = vsyncadd %s245, %s250
          %s252 = sadd.s32 %s28, %s27
          %s253 = smul.addr %s252, 128
          %s254 = scalar_lea.hbm %s1, %s253
          %s256 = sshll.u32 %s248, 4
          %s257 = int_to_ptr.vmem [resolvable:$true] %s256
          %259 = dma.hbm_to_vmem [thread:$0]  %s254, 128, %s257, %s245
        $region36: #{tpu_custom_call.1} parent=27 // pred_fallthru
          _
      $region28: #{tpu_custom_call.1} parent=5 // pred_fallthru
        _
      %p260 = scmp.le.s32.totalorder 1, %s20
      %p261 = scmp.lt.s32.totalorder %s20, 3
      %p262 = pnand %p260, %p261
      %p263 = pneg %p262
      // Predicated region
      $region37: #{tpu_custom_call.1} parent=5 // pred_check
        _
      $region38: #{tpu_custom_call.1} parent=5 // pred_check_branch
        %265 = sbr.rel (%p262) target = $region40
      $region39: #{tpu_custom_call.1} parent=5 // pred_region
        %s266 = ssub.s32 %s20, 1
        %s267 = sand.u32 %s47, 1
        %s268 = scalar_lea.sflag [#allocation3], %s267
        %s269 = sand.u32 %s47, 1
        %s270 = smul.addr %s269, 8
        %s271 = scalar_lea.vmem [#allocation2], %s270
        // Predicated region
        $region41: #{tpu_custom_call.1} parent=39 // pred_check
          %p272 = pneg %p60
        $region42: #{tpu_custom_call.1} parent=39 // pred_check_branch
          %274 = sbr.rel (%p272) target = $region44
        $region43: #{tpu_custom_call.1} parent=39 // pred_region
          %275 = dma.done %s268, 128
        $region44: #{tpu_custom_call.1} parent=39 // pred_fallthru
          _
        %s276 = sand.u32 %s25, 1
        %s277 = scalar_lea.sflag [#allocation6], %s276
        %s278 = sand.u32 %s75, 1
        %s279 = smul.addr %s278, 8
        %s280 = scalar_lea.vmem [#allocation5], %s279
        // Predicated region
        $region45: #{tpu_custom_call.1} parent=39 // pred_check
          %p281 = pneg %p88
        $region46: #{tpu_custom_call.1} parent=39 // pred_check_branch
          %283 = sbr.rel (%p281) target = $region48
        $region47: #{tpu_custom_call.1} parent=39 // pred_region
          %284 = dma.done %s277, 128
        $region48: #{tpu_custom_call.1} parent=39 // pred_fallthru
          _
        // Predicated region
        $region49: #{tpu_custom_call.1} parent=39 // pred_check
          %p285 = pneg %p114
        $region50: #{tpu_custom_call.1} parent=39 // pred_check_branch
          %287 = sbr.rel (%p285) target = $region52
        $region51: #{tpu_custom_call.1} parent=39 // pred_region
          %288 = dma.done [#allocation6], 128
        $region52: #{tpu_custom_call.1} parent=39 // pred_fallthru
          _
        %s289 = sand.u32 %s47, 1
        %s290 = scalar_lea.sflag [#allocation3], %s289
        %s291 = sand.u32 %s47, 1
        %s292 = smul.addr %s291, 8
        %s293 = scalar_lea.vmem [#allocation2], %s292
        %p294 = pneg %p60
        %p295 = pneg %p57
        %s296 = sand.u32 %s25, 1
        %s297 = scalar_lea.sflag [#allocation6], %s296
        %s298 = sand.u32 %s75, 1
        %s299 = smul.addr %s298, 8
        %s300 = scalar_lea.vmem [#allocation5], %s299
        %p301 = pneg %p88
        %p302 = pneg %p85
        %p303 = pneg %p114
        %p304 = pneg %p111
        %p305 = pneg %p135
        %p306 = pneg %p132
        %p307 = pneg %p156
        %p308 = pneg %p153
        %p309 = pneg %p184
        %p310 = pneg %p181
        %s311 = sand.u32 %s171, 1
        %s312 = scalar_lea.sflag [#allocation4], %s311
        %s313 = sand.u32 %s171, 1
        %s314 = smul.addr %s313, 4
        %s315 = scalar_lea.vmem [#allocation8], %s314
        %v316 = vld [vmem:[%s271] sm:$0xff]
        %v317 = vld [vmem:[%s280] sm:$0xff]
        %v318 = vadd.f32 %v316, %v317
        %v319 = vld [vmem:[#allocation7] sm:$0xff]
        %v320 = vadd.f32 %v318, %v319
        %v321 = vld [vmem:[%s3] sm:$0x1]
        %v322 = vld [vmem:[%s4] sm:$0x1]
        %vm323 = vcmask 261120
        %v324 = vsel %vm323, %v320, 0.0
        %325 = vadd.xlane.f32.xlu0 %v324
        %v326 = vpop.xlane.xlu0 %325
        %v327 = vrcp.pop 32.0
        %v328 = vmul.f32 %v326, %v327
        %v329 = vsub.f32 %v320, %v328
        %v330 = vmul.f32 %v329, %v329
        %v331 = vsel %vm323, %v330, 0.0
        %332 = vadd.xlane.f32.xlu0 %v331
        %v333 = vpop.xlane.xlu0 %332
        %v334 = vmul.f32 %v333, %v327
        %v335 = vadd.f32 %v334, 1e-12
        %v336 = vrsqrt.pop %v335
        %v337 = vmul.f32 %v329, %v336
        %v339 = vlaneseq
        %v340 = vshrl.u32 %v339, 7
        %v341 = vsub.s32 0, %v340
        %v342 = vrot.slane %v321, %v341
        %v344 = vmul.f32 %v337, %v342
        %v346 = vlaneseq
        %v347 = vshrl.u32 %v346, 7
        %v348 = vsub.s32 0, %v347
        %v349 = vrot.slane %v322, %v348
        %v351 = vadd.f32 %v344, %v349
        %v352 = vpack.c.bf16 %v351, %v351
        %vm353 = vcmask 257024
        %354 = vst.msk [vmem:[%s315] sm:$0xf] %vm353, %v352
        %s355 = sand.u32 %s171, 1
        %s356 = scalar_lea.sflag [#allocation4], %s355
        %s357 = sand.u32 %s171, 1
        %s358 = smul.addr %s357, 4
        %s359 = scalar_lea.vmem [#allocation8], %s358
        // Predicated region
        $region53: #{tpu_custom_call.1} parent=39 // pred_check
          %p360 = pneg %p181
        $region54: #{tpu_custom_call.1} parent=39 // pred_check_branch
          %362 = sbr.rel (%p360) target = $region56
        $region55: #{tpu_custom_call.1} parent=39 // pred_region
          %s364 = ssub.s32 64, 64
          %365 = vsyncadd %s356, %s364
          %s366 = sadd.s32 %s30, %s29
          %s367 = smul.addr %s366, 64
          %s368 = scalar_lea.hbm %s5, %s367
          %s370 = sshll.u32 %s359, 4
          %s371 = int_to_ptr.vmem [resolvable:$true] %s370
          %373 = dma.vmem_to_hbm [thread:$0]  %s371, 64, %s368, %s356
        $region56: #{tpu_custom_call.1} parent=39 // pred_fallthru
          _
      $region40: #{tpu_custom_call.1} parent=5 // pred_fallthru
        _
      %p374 = scmp.le.s32.totalorder 2, %s20
      // Predicated region
      $region57: #{tpu_custom_call.1} parent=5 // pred_check
        %p375 = pneg %p374
      $region58: #{tpu_custom_call.1} parent=5 // pred_check_branch
        %377 = sbr.rel (%p375) target = $region60
      $region59: #{tpu_custom_call.1} parent=5 // pred_region
        %s378 = ssub.s32 %s20, 2
        // Predicated region
        $region61: #{tpu_custom_call.1} parent=59 // pred_check
          %p379 = pneg %p187
        $region62: #{tpu_custom_call.1} parent=59 // pred_check_branch
          %381 = sbr.rel (%p379) target = $region64
        $region63: #{tpu_custom_call.1} parent=59 // pred_region
          %s382 = sand.u32 %s172, 1
          %s383 = scalar_lea.sflag [#allocation4], %s382
          %s384 = sand.u32 %s172, 1
          %s385 = smul.addr %s384, 4
          %s386 = scalar_lea.vmem [#allocation8], %s385
          %387 = dma.done %s383, 64
        $region64: #{tpu_custom_call.1} parent=59 // pred_fallthru
          _
      $region60: #{tpu_custom_call.1} parent=5 // pred_fallthru
        _
    $region6: #{tpu_custom_call.1} parent=1 // loop_footer
      %s24 = sadd.s32 1, %s20
    $region7: #{tpu_custom_call.1} parent=1 // loop_footer_branch
      %19 = sbr.rel target = $region3
    $region8: #{tpu_custom_call.1} parent=1 // loop_exit
      _
    %388 = vsyncpa [#allocation3], 1
    %s389 = scalar_lea.sflag [#allocation3], 1
    %390 = vsyncpa %s389, 1
    %391 = vsyncpa [#allocation6], 1
    %s392 = scalar_lea.sflag [#allocation6], 1
    %393 = vsyncpa %s392, 1
    %394 = vsyncpa [#allocation4], 1
    %s395 = scalar_lea.sflag [#allocation4], 1
    %396 = vsyncpa %s395, 1

</llo_original>
